<compile_context>
chip_gen: v5e
topology: v5e:2x2
jax: 0.10.0
libtpu: 0.0.40
codegen_flags: <defaults>
</compile_context>

<pallas_src>
import functools

import jax
import jax.numpy as jnp
from jax import lax
from jax.experimental import pallas as pl
from jax.experimental.pallas import tpu as pltpu


_MASK_VALUE = -1e6    # matches the PyTorch reference masked_softmax fill value
_DROP_VALUE = -1e30   # for key-padding columns introduced by tiling (exp -> 0)
_NEG_INIT = -1e30     # running-max init (finite; avoids inf arithmetic)


def _round_up(x, m):
    return ((x + m - 1) // m) * m


# ----------------------------------------------------------------------------
# Kernel: grid = (batch tiles, query tiles, key tiles); K innermost (arbitrary)
# ----------------------------------------------------------------------------
def _additive_attention_kernel(
        tile_max_ref,                        # SMEM (nb*nq,) int32 scalar prefetch
        q_ref, k_ref, v_ref, vlen_ref,       # VMEM inputs
        wq_ref, wk_ref, wv_ref,              # resident weights
        out_ref, *rest,                      # outputs then scratch
        with_scores, k_orig):
    if with_scores:
        scores_ref = rest[0]
        qp_scr, m_scr, l_scr, acc_scr = rest[1:]
    else:
        scores_ref = None
        qp_scr, m_scr, l_scr, acc_scr = rest

    bi, qi, ki = pl.program_id(0), pl.program_id(1), pl.program_id(2)
    nq, nk = pl.num_programs(1), pl.num_programs(2)
    bb, bq, h = qp_scr.shape
    bk = k_ref.shape[1]
    k_start = ki * bk

    # --- once per (b,q) tile: query projection (MXU) + online-softmax state.
    @pl.when(ki == 0)
    def _init():
        q2d = q_ref[...].reshape(bb * bq, q_ref.shape[-1])
        qp = jnp.dot(q2d, wq_ref[...], preferred_element_type=jnp.float32)
        qp_scr[...] = qp.reshape(bb, bq, h)
        m_scr[...] = jnp.full(m_scr.shape, _NEG_INIT, dtype=jnp.float32)
        l_scr[...] = jnp.zeros(l_scr.shape, dtype=jnp.float32)
        acc_scr[...] = jnp.zeros(acc_scr.shape, dtype=jnp.float32)

    # Max valid length over this (b,q) block (from SMEM) -> skip masked K tiles.
    tmax = tile_max_ref[bi * nq + qi]

    if with_scores:
        # Skipped tiles are fully masked; emit the reference mask value.
        @pl.when(k_start >= tmax)
        def _fill():
            scores_ref[...] = jnp.full(scores_ref.shape, _MASK_VALUE, jnp.float32)

    @pl.when(k_start < tmax)
    def _compute():
        # Key projection for this K tile (MXU, batch fused into M).
        k2d = k_ref[...].reshape(bb * bk, k_ref.shape[-1])
        kp = jnp.dot(k2d, wk_ref[...], preferred_element_type=jnp.float32)
        kp = kp.reshape(bb, bk, h)

        # Additive feature + tanh (EUP): (bb, bq, bk, h) f32 — the only big slab.
        feat = jnp.tanh(qp_scr[...][:, :, None, :] + kp[:, None, :, :])

        # w_v contraction over H on the MXU (not VPU-mul + XLU lane reduce).
        s = jnp.dot(feat.reshape(bb * bq * bk, h), wv_ref[...],
                    preferred_element_type=jnp.float32)
        s = s.reshape(bb, bq, bk)

        # Exact int32 masking against the global key index.
        col = lax.broadcasted_iota(jnp.int32, (bb, bq, bk), 2) + k_start
        s = jnp.where(col < vlen_ref[...], s, jnp.float32(_MASK_VALUE))
        s = jnp.where(col < k_orig, s, jnp.float32(_DROP_VALUE))  # K padding

        if with_scores:
            scores_ref[:, 0, :, :] = s

        # Online softmax update + attn @ V accumulation (MXU, f32 accumulator).
        m_prev = m_scr[...]
        m_new = jnp.maximum(m_prev, jnp.max(s, axis=-1, keepdims=True))
        alpha = jnp.exp(m_prev - m_new)
        p = jnp.exp(s - m_new)
        l_scr[...] = alpha * l_scr[...] + jnp.sum(p, axis=-1, keepdims=True)
        acc_scr[...] = alpha * acc_scr[...] + jnp.einsum(
            'bqk,bkd->bqd', p.astype(v_ref.dtype), v_ref[...],
            preferred_element_type=jnp.float32)
        m_scr[...] = m_new

    # --- finalize after the last K tile.
    @pl.when(ki == nk - 1)
    def _finalize():
        inv = pl.reciprocal(l_scr[...], approx=True)
        out_ref[...] = (acc_scr[...] * inv).astype(out_ref.dtype)


# ----------------------------------------------------------------------------
# Wrapper
# ----------------------------------------------------------------------------
def additive_attention(queries, keys, values, valid_lens, w_q, w_k, w_v,
                       *, return_attention_weights=False,
                       block_q=None, block_k=None, block_b=None):
    """queries (B,Q,Dq), keys (B,K,Dk), values (B,K,Dv).

    w_q: (H, Dq), w_k: (H, Dk), w_v: (1, H)   (PyTorch nn.Linear layouts)
    valid_lens: None, (B,) or (B, Q).
    Returns out (B,Q,Dv) [dtype of values], plus attention weights (B,Q,K)
    when return_attention_weights=True.
    """
    B, Q, Dq = queries.shape
    _, K, Dk = keys.shape
    Dv = values.shape[-1]
    H = w_q.shape[0]
    out_dtype = values.dtype

    # ---- tile selection (sublane-aligned; slab bounded for VMEM) ----
    bq = block_q if block_q is not None else min(128, _round_up(Q, 8))
    bq = min(max(8, _round_up(bq, 8)), _round_up(Q, 8))
    bk = block_k if block_k is not None else min(128, _round_up(K, 8))
    bk = min(max(8, _round_up(bk, 8)), _round_up(K, 8))
    bb = block_b if block_b is not None else max(1, min(B, 256 // bq))
    bb = max(1, min(bb, B))
    if block_q is None and block_k is None and block_b is None:
        # Bound the live (bb, bq, bk, H) f32 tanh slab.
        # NOTE: halve this budget when targeting v7x (64 MiB VMEM vs 128 MiB).
        budget = 8 * 1024 * 1024
        while bb * bq * bk * H * 4 > budget and bk > 8:
            bk = max(8, _round_up(bk // 2, 8))
        while bb * bq * bk * H * 4 > budget and bb > 1:
            bb = max(1, bb // 2)
        while bb * bq * bk * H * 4 > budget and bq > 8:
            bq = max(8, _round_up(bq // 2, 8))

    B_pad, Q_pad, K_pad = _round_up(B, bb), _round_up(Q, bq), _round_up(K, bk)
    nb, nq, nk = B_pad // bb, Q_pad // bq, K_pad // bk

    # ---- pad to tile multiples (native dtype; no f32 upcast) ----
    q_p = jnp.pad(queries, ((0, B_pad - B), (0, Q_pad - Q), (0, 0)))
    k_p = jnp.pad(keys,    ((0, B_pad - B), (0, K_pad - K), (0, 0)))
    v_p = jnp.pad(values,  ((0, B_pad - B), (0, K_pad - K), (0, 0)))

    # ---- valid lengths as exact int32 ----
    if valid_lens is None:
        vlen_bq = jnp.full((B, Q), K, dtype=jnp.int32)
    elif valid_lens.ndim == 1:
        vlen_bq = jnp.broadcast_to(valid_lens.astype(jnp.int32)[:, None], (B, Q))
    else:
        vlen_bq = valid_lens.astype(jnp.int32)
    vlen_bq = jnp.clip(vlen_bq, 0, K)
    # Padded rows get length 1 (kept finite, sliced off; never inflate tile_max).
    vlen_bq = jnp.pad(vlen_bq, ((0, B_pad - B), (0, Q_pad - Q)), constant_values=1)

    # Per-(b,q)-block max valid length for K-tile skipping (scalar prefetch).
    # Rows with valid_len == 0 must see every key (reference => uniform softmax).
    v4 = vlen_bq.reshape(nb, bb, nq, bq)
    blk_max = v4.max(axis=(1, 3))
    blk_min = v4.min(axis=(1, 3))
    tile_max = jnp.where(blk_min == 0, K_pad, blk_max).astype(jnp.int32).reshape(-1)
    vlen_in = vlen_bq[..., None]                       # (B_pad, Q_pad, 1) int32

    # ---- weights in matmul-friendly layout (kept in their native dtype) ----
    wq_t = jnp.asarray(w_q).T                          # (Dq, H)
    wk_t = jnp.asarray(w_k).T                          # (Dk, H)
    wv_c = jnp.asarray(w_v).reshape(H, 1)              # (H, 1)

    kernel = functools.partial(_additive_attention_kernel,
                               with_scores=return_attention_weights, k_orig=K)

    in_specs = [
        pl.BlockSpec((bb, bq, Dq), lambda b, q, k, tm: (b, q, 0)),   # queries
        pl.BlockSpec((bb, bk, Dk), lambda b, q, k, tm: (b, k, 0)),   # keys
        pl.BlockSpec((bb, bk, Dv), lambda b, q, k, tm: (b, k, 0)),   # values
        pl.BlockSpec((bb, bq, 1),  lambda b, q, k, tm: (b, q, 0)),   # valid lens
        # Constant-index weight blocks are fetched once and stay resident
        # (single-buffering them would save a bit more VMEM at large H).
        pl.BlockSpec((Dq, H), lambda b, q, k, tm: (0, 0)),           # W_q^T
        pl.BlockSpec((Dk, H), lambda b, q, k, tm: (0, 0)),           # W_k^T
        pl.BlockSpec((H, 1),  lambda b, q, k, tm: (0, 0)),           # w_v
    ]
    out_shapes = [jax.ShapeDtypeStruct((B_pad, Q_pad, Dv), out_dtype)]
    out_specs = [pl.BlockSpec((bb, bq, Dv), lambda b, q, k, tm: (b, q, 0))]
    if return_attention_weights:
        # Optional raw masked scores, stored as (B, k_tile, Q, bk) so every
        # per-step block write is layout-legal; softmax over K is a trivial
        # epilogue outside the kernel (online softmax streams the K axis).
        out_shapes.append(
            jax.ShapeDtypeStruct((B_pad, nk, Q_pad, bk), jnp.float32))
        out_specs.append(
            pl.BlockSpec((bb, 1, bq, bk), lambda b, q, k, tm: (b, k, q, 0)))

    scratch_shapes = [
        pltpu.VMEM((bb, bq, H), jnp.float32),    # cached query projection
        pltpu.VMEM((bb, bq, 1), jnp.float32),    # running max
        pltpu.VMEM((bb, bq, 1), jnp.float32),    # running sum
        pltpu.VMEM((bb, bq, Dv), jnp.float32),   # running attn @ V
    ]

    grid_spec = pltpu.PrefetchScalarGridSpec(
        num_scalar_prefetch=1,
        grid=(nb, nq, nk),
        in_specs=in_specs,
        out_specs=tuple(out_specs),
        scratch_shapes=scratch_shapes,
    )

    results = pl.pallas_call(
        kernel,
        grid_spec=grid_spec,
        out_shape=tuple(out_shapes),
        compiler_params=pltpu.CompilerParams(
            dimension_semantics=("parallel", "parallel", "arbitrary"),
            vmem_limit_bytes=48 * 1024 * 1024,   # explicit; safe on v5e/v6e/v7x
        ),
    )(tile_max, q_p, k_p, v_p, vlen_in, wq_t, wk_t, wv_c)

    out = results[0][:B, :Q, :]
    if not return_attention_weights:
        return out
    scores = results[1].transpose(0, 2, 1, 3).reshape(B_pad, Q_pad, K_pad)
    scores = scores[:B, :Q, :K]
    attn = jax.nn.softmax(scores, axis=-1).astype(queries.dtype)
    return out, attn


# ----------------------------------------------------------------------------
# Pure-JAX reference (mirrors the PyTorch module)
# ----------------------------------------------------------------------------
def additive_attention_ref(queries, keys, values, valid_lens, w_q, w_k, w_v):
    q = queries @ w_q.T
    k = keys @ w_k.T
    features = jnp.tanh(q[:, :, None, :] + k[:, None, :, :])
    scores = jnp.squeeze(features @ w_v.T, -1)
    B, Q, K = scores.shape
    if valid_lens is not None:
        vl = valid_lens
        if vl.ndim == 1:
            vl = jnp.broadcast_to(vl[:, None], (B, Q))
        mask = jnp.arange(K)[None, None, :] < vl[..., None]
        scores = jnp.where(mask, scores, -1e6)
    attn = jax.nn.softmax(scores, axis=-1)
    return attn @ values, attn


if __name__ == "__main__":
    key = jax.random.PRNGKey(0)
    B, Q, K = 2, 5, 24
    Dq, Dk, Dv, H = 16, 16, 32, 32

    kq, kk, kv, kwq, kwk, kwv = jax.random.split(key, 6)
    queries = jax.random.normal(kq, (B, Q, Dq), dtype=jnp.float32)
    keys = jax.random.normal(kk, (B, K, Dk), dtype=jnp.float32)
    values = jax.random.normal(kv, (B, K, Dv), dtype=jnp.float32)
    w_q = jax.random.normal(kwq, (H, Dq), dtype=jnp.float32) * 0.1
    w_k = jax.random.normal(kwk, (H, Dk), dtype=jnp.float32) * 0.1
    w_v = jax.random.normal(kwv, (1, H), dtype=jnp.float32) * 0.1

    # 1) 1-D valid_lens with small K tiles: exercises the multi-tile online
    #    softmax and the fully-masked K-tile skip (batch 0 skips 2 of 3 tiles).
    valid_lens = jnp.array([5, 17], dtype=jnp.int32)
    out, attn = additive_attention(queries, keys, values, valid_lens,
                                   w_q, w_k, w_v, return_attention_weights=True,
                                   block_q=8, block_k=8, block_b=1)
    jax.block_until_ready((out, attn))
    ref_out, ref_attn = additive_attention_ref(queries, keys, values,
                                               valid_lens, w_q, w_k, w_v)
    assert out.shape == (B, Q, Dv) and attn.shape == (B, Q, K)
    assert bool(jnp.all(jnp.isfinite(out))) and bool(jnp.all(jnp.isfinite(attn)))
    assert jnp.allclose(out, ref_out, rtol=2e-3, atol=2e-3)
    assert jnp.allclose(attn, ref_attn, rtol=2e-3, atol=2e-3)
    assert float(jnp.max(attn[0, :, 5:])) < 1e-6
    assert float(jnp.max(attn[1, :, 17:])) < 1e-6

    # 2) valid_lens=None, default tile selection, output only.
    out2 = additive_attention(queries, keys, values, None, w_q, w_k, w_v)
    jax.block_until_ready(out2)
    ref_out2, _ = additive_attention_ref(queries, keys, values, None,
                                         w_q, w_k, w_v)
    assert jnp.allclose(out2, ref_out2, rtol=2e-3, atol=2e-3)

    # 3) 2-D (per-query) valid_lens.
    vl2 = jnp.array([[1, 2, 3, 4, 5], [6, 9, 12, 20, 24]], dtype=jnp.int32)
    out3, attn3 = additive_attention(queries, keys, values, vl2, w_q, w_k, w_v,
                                     return_attention_weights=True)
    jax.block_until_ready((out3, attn3))
    ref_out3, ref_attn3 = additive_attention_ref(queries, keys, values, vl2,
                                                 w_q, w_k, w_v)
    assert jnp.allclose(out3, ref_out3, rtol=2e-3, atol=2e-3)
    assert jnp.allclose(attn3, ref_attn3, rtol=2e-3, atol=2e-3)

    print("KERNEL_OK")
</pallas_src>

<mosaic_0001>
module attributes {stable_mosaic.version = 11 : i64} {
  func.func @_additive_attention_kernel(%arg0: i32, %arg1: i32, %arg2: i32, %arg3: memref<2xi32, #tpu.memory_space<smem>>, %arg4: memref<1x8x16xf32, #tpu.memory_space<vmem>>, %arg5: memref<1x8x16xf32, #tpu.memory_space<vmem>>, %arg6: memref<1x8x32xf32, #tpu.memory_space<vmem>>, %arg7: memref<1x8x1xi32, #tpu.memory_space<vmem>>, %arg8: memref<16x32xf32, #tpu.memory_space<vmem>>, %arg9: memref<16x32xf32, #tpu.memory_space<vmem>>, %arg10: memref<32x1xf32, #tpu.memory_space<vmem>>, %arg11: memref<1x8x32xf32, #tpu.memory_space<vmem>>, %arg12: memref<1x1x8x8xf32, #tpu.memory_space<vmem>>, %arg13: memref<1x8x32xf32, #tpu.memory_space<vmem>>, %arg14: memref<1x8x1xf32, #tpu.memory_space<vmem>>, %arg15: memref<1x8x1xf32, #tpu.memory_space<vmem>>, %arg16: memref<1x8x32xf32, #tpu.memory_space<vmem>>) attributes {dimension_semantics = [#tpu.dimension_semantics<parallel>, #tpu.dimension_semantics<parallel>, #tpu.dimension_semantics<arbitrary>], iteration_bounds = array<i64: 2, 1, 3>, scalar_prefetch = 1 : i64, scratch_operands = 4 : i64, tpu.core_type = #tpu.core_type<tc>, window_params = [{transform_indices = @transform_0, window_bounds = array<i64: 1, 8, 16>}, {transform_indices = @transform_1, window_bounds = array<i64: 1, 8, 16>}, {transform_indices = @transform_2, window_bounds = array<i64: 1, 8, 32>}, {transform_indices = @transform_3, window_bounds = array<i64: 1, 8, 1>}, {pipeline_mode = #tpu.pipeline_mode<synchronous>, transform_indices = @transform_4, window_bounds = array<i64: 16, 32>}, {pipeline_mode = #tpu.pipeline_mode<synchronous>, transform_indices = @transform_5, window_bounds = array<i64: 16, 32>}, {pipeline_mode = #tpu.pipeline_mode<synchronous>, transform_indices = @transform_6, window_bounds = array<i64: 32, 1>}, {transform_indices = @transform_7, window_bounds = array<i64: 1, 8, 32>}, {transform_indices = @transform_8, window_bounds = array<i64: 1, 1, 8, 8>}]} {
    %c8_i32 = arith.constant 8 : i32
    %0 = arith.muli %arg2, %c8_i32 : i32
    %c0_i32 = arith.constant 0 : i32
    %1 = arith.cmpi eq, %arg2, %c0_i32 : i32
    %2 = arith.extui %1 : i1 to i32
    %c0_i32_0 = arith.constant 0 : i32
    %3 = arith.cmpi ne, %2, %c0_i32_0 : i32
    scf.if %3 {
      %c0 = arith.constant 0 : index
      %c0_4 = arith.constant 0 : index
      %c0_5 = arith.constant 0 : index
      %17 = vector.load %arg4[%c0, %c0_4, %c0_5] : memref<1x8x16xf32, #tpu.memory_space<vmem>>, vector<1x8x16xf32>
      %18 = vector.shape_cast %17 : vector<1x8x16xf32> to vector<8x16xf32>
      %c0_6 = arith.constant 0 : index
      %c0_7 = arith.constant 0 : index
      %19 = vector.load %arg8[%c0_6, %c0_7] : memref<16x32xf32, #tpu.memory_space<vmem>>, vector<16x32xf32>
      %cst = arith.constant dense<0.000000e+00> : vector<8x32xf32>
      %20 = tpu.matmul %18, %19, %cst {dimension_numbers = #tpu.dot_dimension_numbers<[1], [0], [0], [1], [0, 0, 1, 1], [], []>} : vector<8x16xf32>, vector<16x32xf32>, vector<8x32xf32> -> vector<8x32xf32>
      %21 = vector.shape_cast %20 : vector<8x32xf32> to vector<1x8x32xf32>
      %c0_8 = arith.constant 0 : index
      %c0_9 = arith.constant 0 : index
      %c0_10 = arith.constant 0 : index
      %22 = vector.load %arg13[%c0_8, %c0_9, %c0_10] : memref<1x8x32xf32, #tpu.memory_space<vmem>>, vector<1x8x32xf32>
      tpu.vector_store %arg13[%c0_8, %c0_9, %c0_10], %21 {strides = array<i32>} : memref<1x8x32xf32, #tpu.memory_space<vmem>>, vector<1x8x32xf32>,
      %cst_11 = arith.constant -1.000000e+30 : f32
      %23 = vector.broadcast %cst_11 : f32 to vector<1x8x1xf32>
      %c0_12 = arith.constant 0 : index
      %c0_13 = arith.constant 0 : index
      %c0_14 = arith.constant 0 : index
      %24 = vector.load %arg14[%c0_12, %c0_13, %c0_14] : memref<1x8x1xf32, #tpu.memory_space<vmem>>, vector<1x8x1xf32>
      tpu.vector_store %arg14[%c0_12, %c0_13, %c0_14], %23 {strides = array<i32>} : memref<1x8x1xf32, #tpu.memory_space<vmem>>, vector<1x8x1xf32>,
      %cst_15 = arith.constant 0.000000e+00 : f32
      %25 = vector.broadcast %cst_15 : f32 to vector<1x8x1xf32>
      %c0_16 = arith.constant 0 : index
      %c0_17 = arith.constant 0 : index
      %c0_18 = arith.constant 0 : index
      %26 = vector.load %arg15[%c0_16, %c0_17, %c0_18] : memref<1x8x1xf32, #tpu.memory_space<vmem>>, vector<1x8x1xf32>
      tpu.vector_store %arg15[%c0_16, %c0_17, %c0_18], %25 {strides = array<i32>} : memref<1x8x1xf32, #tpu.memory_space<vmem>>, vector<1x8x1xf32>,
      %cst_19 = arith.constant 0.000000e+00 : f32
      %27 = vector.broadcast %cst_19 : f32 to vector<1x8x32xf32>
      %c0_20 = arith.constant 0 : index
      %c0_21 = arith.constant 0 : index
      %c0_22 = arith.constant 0 : index
      %28 = vector.load %arg16[%c0_20, %c0_21, %c0_22] : memref<1x8x32xf32, #tpu.memory_space<vmem>>, vector<1x8x32xf32>
      tpu.vector_store %arg16[%c0_20, %c0_21, %c0_22], %27 {strides = array<i32>} : memref<1x8x32xf32, #tpu.memory_space<vmem>>, vector<1x8x32xf32>,
    } else {
    }
    %c1_i32 = arith.constant 1 : i32
    %4 = arith.muli %arg0, %c1_i32 : i32
    %5 = arith.addi %4, %arg1 : i32
    %6 = arith.index_cast %5 : i32 to index
    %7 = memref.load %arg3[%6] : memref<2xi32, #tpu.memory_space<smem>>
    %8 = arith.cmpi sge, %0, %7 : i32
    %9 = arith.extui %8 : i1 to i32
    %c0_i32_1 = arith.constant 0 : i32
    %10 = arith.cmpi ne, %9, %c0_i32_1 : i32
    scf.if %10 {
      %cst = arith.constant -1.000000e+06 : f32
      %17 = vector.broadcast %cst : f32 to vector<1x1x8x8xf32>
      %c0 = arith.constant 0 : index
      %c0_4 = arith.constant 0 : index
      %c0_5 = arith.constant 0 : index
      %c0_6 = arith.constant 0 : index
      %18 = vector.load %arg12[%c0, %c0_4, %c0_5, %c0_6] : memref<1x1x8x8xf32, #tpu.memory_space<vmem>>, vector<1x1x8x8xf32>
      tpu.vector_store %arg12[%c0, %c0_4, %c0_5, %c0_6], %17 {strides = array<i32>} : memref<1x1x8x8xf32, #tpu.memory_space<vmem>>, vector<1x1x8x8xf32>,
    } else {
    }
    %11 = arith.cmpi slt, %0, %7 : i32
    %12 = arith.extui %11 : i1 to i32
    %c0_i32_2 = arith.constant 0 : i32
    %13 = arith.cmpi ne, %12, %c0_i32_2 : i32
    scf.if %13 {
      %c0 = arith.constant 0 : index
      %c0_4 = arith.constant 0 : index
      %c0_5 = arith.constant 0 : index
      %17 = vector.load %arg5[%c0, %c0_4, %c0_5] : memref<1x8x16xf32, #tpu.memory_space<vmem>>, vector<1x8x16xf32>
      %18 = vector.shape_cast %17 : vector<1x8x16xf32> to vector<8x16xf32>
      %c0_6 = arith.constant 0 : index
      %c0_7 = arith.constant 0 : index
      %19 = vector.load %arg9[%c0_6, %c0_7] : memref<16x32xf32, #tpu.memory_space<vmem>>, vector<16x32xf32>
      %cst = arith.constant dense<0.000000e+00> : vector<8x32xf32>
      %20 = tpu.matmul %18, %19, %cst {dimension_numbers = #tpu.dot_dimension_numbers<[1], [0], [0], [1], [0, 0, 1, 1], [], []>} : vector<8x16xf32>, vector<16x32xf32>, vector<8x32xf32> -> vector<8x32xf32>
      %21 = vector.shape_cast %20 : vector<8x32xf32> to vector<1x8x32xf32>
      %c0_8 = arith.constant 0 : index
      %c0_9 = arith.constant 0 : index
      %c0_10 = arith.constant 0 : index
      %22 = vector.load %arg13[%c0_8, %c0_9, %c0_10] : memref<1x8x32xf32, #tpu.memory_space<vmem>>, vector<1x8x32xf32>
      %23 = vector.shape_cast %22 : vector<1x8x32xf32> to vector<1x8x1x32xf32>
      %24 = vector.shape_cast %21 : vector<1x8x32xf32> to vector<1x1x8x32xf32>
      %25 = vector.broadcast %23 : vector<1x8x1x32xf32> to vector<1x8x8x32xf32>
      %26 = vector.broadcast %24 : vector<1x1x8x32xf32> to vector<1x8x8x32xf32>
      %27 = arith.addf %25, %26 : vector<1x8x8x32xf32>
      %28 = math.tanh %27 : vector<1x8x8x32xf32>
      %29 = vector.shape_cast %28 : vector<1x8x8x32xf32> to vector<64x32xf32>
      %c0_11 = arith.constant 0 : index
      %c0_12 = arith.constant 0 : index
      %30 = vector.load %arg10[%c0_11, %c0_12] : memref<32x1xf32, #tpu.memory_space<vmem>>, vector<32x1xf32>
      %cst_13 = arith.constant dense<0.000000e+00> : vector<64x1xf32>
      %31 = tpu.matmul %29, %30, %cst_13 {dimension_numbers = #tpu.dot_dimension_numbers<[1], [0], [0], [1], [0, 0, 1, 1], [], []>} : vector<64x32xf32>, vector<32x1xf32>, vector<64x1xf32> -> vector<64x1xf32>
      %32 = vector.shape_cast %31 : vector<64x1xf32> to vector<1x8x8xf32>
      %33 = tpu.iota {dimensions = array<i32: 2>} : vector<1x8x8xi32>
      %34 = vector.broadcast %0 : i32 to vector<1x8x8xi32>
      %35 = arith.addi %33, %34 : vector<1x8x8xi32>
      %c0_14 = arith.constant 0 : index
      %c0_15 = arith.constant 0 : index
      %c0_16 = arith.constant 0 : index
      %36 = vector.load %arg7[%c0_14, %c0_15, %c0_16] : memref<1x8x1xi32, #tpu.memory_space<vmem>>, vector<1x8x1xi32>
      %37 = vector.broadcast %36 : vector<1x8x1xi32> to vector<1x8x8xi32>
      %38 = arith.cmpi slt, %35, %37 : vector<1x8x8xi32>
      %cst_17 = arith.constant -1.000000e+06 : f32
      %39 = vector.broadcast %cst_17 : f32 to vector<1x8x8xf32>
      %40 = arith.select %38, %32, %39 : vector<1x8x8xi1>, vector<1x8x8xf32>
      %c24_i32 = arith.constant 24 : i32
      %41 = vector.broadcast %c24_i32 : i32 to vector<1x8x8xi32>
      %42 = arith.cmpi slt, %35, %41 : vector<1x8x8xi32>
      %cst_18 = arith.constant -1.000000e+30 : f32
      %43 = vector.broadcast %cst_18 : f32 to vector<1x8x8xf32>
      %44 = arith.select %42, %40, %43 : vector<1x8x8xi1>, vector<1x8x8xf32>
      %c0_19 = arith.constant 0 : index
      %c0_20 = arith.constant 0 : index
      %c0_21 = arith.constant 0 : index
      %c0_22 = arith.constant 0 : index
      %45 = vector.load %arg12[%c0_19, %c0_20, %c0_21, %c0_22] : memref<1x1x8x8xf32, #tpu.memory_space<vmem>>, vector<1x1x8x8xf32>
      %46 = vector.shape_cast %45 : vector<1x1x8x8xf32> to vector<1x8x8xf32>
      %47 = vector.shape_cast %44 : vector<1x8x8xf32> to vector<1x1x8x8xf32>
      tpu.vector_store %arg12[%c0_19, %c0_20, %c0_21, %c0_22], %47 {strides = array<i32>} : memref<1x1x8x8xf32, #tpu.memory_space<vmem>>, vector<1x1x8x8xf32>,
      %c0_23 = arith.constant 0 : index
      %c0_24 = arith.constant 0 : index
      %c0_25 = arith.constant 0 : index
      %48 = vector.load %arg14[%c0_23, %c0_24, %c0_25] : memref<1x8x1xf32, #tpu.memory_space<vmem>>, vector<1x8x1xf32>
      %cst_26 = arith.constant dense<0xFF800000> : vector<1x8xf32>
      %49 = vector.multi_reduction <maximumf>, %44, %cst_26 [2] : vector<1x8x8xf32> to vector<1x8xf32>
      %50 = vector.shape_cast %49 : vector<1x8xf32> to vector<1x8x1xf32>
      %51 = arith.maximumf %48, %50 : vector<1x8x1xf32>
      %52 = arith.subf %48, %51 : vector<1x8x1xf32>
      %53 = math.exp %52 : vector<1x8x1xf32>
      %54 = vector.broadcast %51 : vector<1x8x1xf32> to vector<1x8x8xf32>
      %55 = arith.subf %44, %54 : vector<1x8x8xf32>
      %56 = math.exp %55 : vector<1x8x8xf32>
      %c0_27 = arith.constant 0 : index
      %c0_28 = arith.constant 0 : index
      %c0_29 = arith.constant 0 : index
      %57 = vector.load %arg15[%c0_27, %c0_28, %c0_29] : memref<1x8x1xf32, #tpu.memory_space<vmem>>, vector<1x8x1xf32>
      %58 = arith.mulf %53, %57 : vector<1x8x1xf32>
      %cst_30 = arith.constant dense<0.000000e+00> : vector<1x8xf32>
      %59 = vector.multi_reduction <add>, %56, %cst_30 [2] : vector<1x8x8xf32> to vector<1x8xf32>
      %60 = vector.shape_cast %59 : vector<1x8xf32> to vector<1x8x1xf32>
      %61 = arith.addf %58, %60 : vector<1x8x1xf32>
      %c0_31 = arith.constant 0 : index
      %c0_32 = arith.constant 0 : index
      %c0_33 = arith.constant 0 : index
      %62 = vector.load %arg15[%c0_31, %c0_32, %c0_33] : memref<1x8x1xf32, #tpu.memory_space<vmem>>, vector<1x8x1xf32>
      tpu.vector_store %arg15[%c0_31, %c0_32, %c0_33], %61 {strides = array<i32>} : memref<1x8x1xf32, #tpu.memory_space<vmem>>, vector<1x8x1xf32>,
      %c0_34 = arith.constant 0 : index
      %c0_35 = arith.constant 0 : index
      %c0_36 = arith.constant 0 : index
      %63 = vector.load %arg16[%c0_34, %c0_35, %c0_36] : memref<1x8x32xf32, #tpu.memory_space<vmem>>, vector<1x8x32xf32>
      %64 = vector.broadcast %53 : vector<1x8x1xf32> to vector<1x8x32xf32>
      %65 = arith.mulf %64, %63 : vector<1x8x32xf32>
      %c0_37 = arith.constant 0 : index
      %c0_38 = arith.constant 0 : index
      %c0_39 = arith.constant 0 : index
      %66 = vector.load %arg6[%c0_37, %c0_38, %c0_39] : memref<1x8x32xf32, #tpu.memory_space<vmem>>, vector<1x8x32xf32>
      "tpu.trace_start"() <{level = 10 : i32, message = "bqk,bkd->bqd"}> : () -> ()
      %cst_40 = arith.constant dense<0.000000e+00> : vector<1x8x32xf32>
      %67 = tpu.matmul %56, %66, %cst_40 {dimension_numbers = #tpu.dot_dimension_numbers<[2], [1], [1], [2], [0, 0, 0, 1, 1, 2], [0], [0]>} : vector<1x8x8xf32>, vector<1x8x32xf32>, vector<1x8x32xf32> -> vector<1x8x32xf32>
      "tpu.trace_stop"() : () -> ()
      %68 = arith.addf %65, %67 : vector<1x8x32xf32>
      %c0_41 = arith.constant 0 : index
      %c0_42 = arith.constant 0 : index
      %c0_43 = arith.constant 0 : index
      %69 = vector.load %arg16[%c0_41, %c0_42, %c0_43] : memref<1x8x32xf32, #tpu.memory_space<vmem>>, vector<1x8x32xf32>
      tpu.vector_store %arg16[%c0_41, %c0_42, %c0_43], %68 {strides = array<i32>} : memref<1x8x32xf32, #tpu.memory_space<vmem>>, vector<1x8x32xf32>,
      %c0_44 = arith.constant 0 : index
      %c0_45 = arith.constant 0 : index
      %c0_46 = arith.constant 0 : index
      %70 = vector.load %arg14[%c0_44, %c0_45, %c0_46] : memref<1x8x1xf32, #tpu.memory_space<vmem>>, vector<1x8x1xf32>
      tpu.vector_store %arg14[%c0_44, %c0_45, %c0_46], %51 {strides = array<i32>} : memref<1x8x1xf32, #tpu.memory_space<vmem>>, vector<1x8x1xf32>,
    } else {
    }
    %c2_i32 = arith.constant 2 : i32
    %14 = arith.cmpi eq, %arg2, %c2_i32 : i32
    %15 = arith.extui %14 : i1 to i32
    %c0_i32_3 = arith.constant 0 : i32
    %16 = arith.cmpi ne, %15, %c0_i32_3 : i32
    scf.if %16 {
      %c0 = arith.constant 0 : index
      %c0_4 = arith.constant 0 : index
      %c0_5 = arith.constant 0 : index
      %17 = vector.load %arg15[%c0, %c0_4, %c0_5] : memref<1x8x1xf32, #tpu.memory_space<vmem>>, vector<1x8x1xf32>
      %18 = tpu.reciprocal %17 {approx = true} : vector<1x8x1xf32> -> vector<1x8x1xf32>
      %c0_6 = arith.constant 0 : index
      %c0_7 = arith.constant 0 : index
      %c0_8 = arith.constant 0 : index
      %19 = vector.load %arg16[%c0_6, %c0_7, %c0_8] : memref<1x8x32xf32, #tpu.memory_space<vmem>>, vector<1x8x32xf32>
      %20 = vector.broadcast %18 : vector<1x8x1xf32> to vector<1x8x32xf32>
      %21 = arith.mulf %19, %20 : vector<1x8x32xf32>
      %c0_9 = arith.constant 0 : index
      %c0_10 = arith.constant 0 : index
      %c0_11 = arith.constant 0 : index
      %22 = vector.load %arg11[%c0_9, %c0_10, %c0_11] : memref<1x8x32xf32, #tpu.memory_space<vmem>>, vector<1x8x32xf32>
      tpu.vector_store %arg11[%c0_9, %c0_10, %c0_11], %21 {strides = array<i32>} : memref<1x8x32xf32, #tpu.memory_space<vmem>>, vector<1x8x32xf32>,
    } else {
    }
    return
  }
  func.func @transform_0(%arg0: i32, %arg1: i32, %arg2: i32, %arg3: memref<2xi32, #tpu.memory_space<smem>>) -> (i32, i32, i32) {
    %c0_i32 = arith.constant 0 : i32
    %c0_i32_0 = arith.constant 0 : i32
    return %arg0, %arg1, %c0_i32 : i32, i32, i32
  }
  func.func @transform_1(%arg0: i32, %arg1: i32, %arg2: i32, %arg3: memref<2xi32, #tpu.memory_space<smem>>) -> (i32, i32, i32) {
    %c0_i32 = arith.constant 0 : i32
    %c0_i32_0 = arith.constant 0 : i32
    return %arg0, %arg2, %c0_i32 : i32, i32, i32
  }
  func.func @transform_2(%arg0: i32, %arg1: i32, %arg2: i32, %arg3: memref<2xi32, #tpu.memory_space<smem>>) -> (i32, i32, i32) {
    %c0_i32 = arith.constant 0 : i32
    %c0_i32_0 = arith.constant 0 : i32
    return %arg0, %arg2, %c0_i32 : i32, i32, i32
  }
  func.func @transform_3(%arg0: i32, %arg1: i32, %arg2: i32, %arg3: memref<2xi32, #tpu.memory_space<smem>>) -> (i32, i32, i32) {
    %c0_i32 = arith.constant 0 : i32
    %c0_i32_0 = arith.constant 0 : i32
    return %arg0, %arg1, %c0_i32 : i32, i32, i32
  }
  func.func @transform_4(%arg0: i32, %arg1: i32, %arg2: i32, %arg3: memref<2xi32, #tpu.memory_space<smem>>) -> (i32, i32) {
    %c0_i32 = arith.constant 0 : i32
    %c0_i32_0 = arith.constant 0 : i32
    %c0_i32_1 = arith.constant 0 : i32
    return %c0_i32, %c0_i32_0 : i32, i32
  }
  func.func @transform_5(%arg0: i32, %arg1: i32, %arg2: i32, %arg3: memref<2xi32, #tpu.memory_space<smem>>) -> (i32, i32) {
    %c0_i32 = arith.constant 0 : i32
    %c0_i32_0 = arith.constant 0 : i32
    %c0_i32_1 = arith.constant 0 : i32
    return %c0_i32, %c0_i32_0 : i32, i32
  }
  func.func @transform_6(%arg0: i32, %arg1: i32, %arg2: i32, %arg3: memref<2xi32, #tpu.memory_space<smem>>) -> (i32, i32) {
    %c0_i32 = arith.constant 0 : i32
    %c0_i32_0 = arith.constant 0 : i32
    %c0_i32_1 = arith.constant 0 : i32
    return %c0_i32, %c0_i32_0 : i32, i32
  }
  func.func @transform_7(%arg0: i32, %arg1: i32, %arg2: i32, %arg3: memref<2xi32, #tpu.memory_space<smem>>) -> (i32, i32, i32) {
    %c0_i32 = arith.constant 0 : i32
    %c0_i32_0 = arith.constant 0 : i32
    return %arg0, %arg1, %c0_i32 : i32, i32, i32
  }
  func.func @transform_8(%arg0: i32, %arg1: i32, %arg2: i32, %arg3: memref<2xi32, #tpu.memory_space<smem>>) -> (i32, i32, i32, i32) {
    %c0_i32 = arith.constant 0 : i32
    %c0_i32_0 = arith.constant 0 : i32
    return %arg0, %arg2, %arg1, %c0_i32 : i32, i32, i32, i32
  }
}

</mosaic_0001>

<llo_original>
// kernel: tpu_custom_call.1
$region0: #{tpu_custom_call.1}
  #allocation0 [shape = 'u32[]', space=smem, size = 0x4, offset = 0x4, fixed_abs, tag = 'smem constant byte address 0x4 - core index']
  #allocation1 [shape = 'u32[72,128]{1,0:T(1,128)}', space=vmem, size = 0x9000, scoped, tag = 'internal scratch']
  #allocation2 [shape = 'f32[1,8,32]{2,1,0:T(8,128)}', space=vmem, size = 0x1000, scoped, tag = 'scratch operand']
  #allocation3 [shape = 'f32[1,8,1]{2,1,0:T(8,128)}', space=vmem, size = 0x1000, scoped, tag = 'scratch operand']
  #allocation4 [shape = 'f32[1,8,1]{2,1,0:T(8,128)}', space=vmem, size = 0x1000, scoped, tag = 'scratch operand']
  #allocation5 [shape = 'f32[1,8,32]{2,1,0:T(8,128)}', space=vmem, size = 0x1000, scoped, tag = 'scratch operand']
  #allocation6 [shape = 's32[1]{0}', space=sflag, size = 0x4, scoped, tag = 'scoped memory for tpu_custom_call.1']
  #allocation7 [shape = 'u8[512]{0}', space=smem, size = 0x200, scoped, tag = 'prefetched SMEM operand 0']
  %s0 = inlined_call_operand.vmem [shape: s32[2], index: 0, kind: input, shape index: {}]
  %s1 = inlined_call_operand.vmem [shape: f32[2,8,16], index: 1, kind: input, shape index: {}]
  %s2 = inlined_call_operand.vmem [shape: f32[2,24,16], index: 2, kind: input, shape index: {}]
  %s3 = inlined_call_operand.vmem [shape: f32[2,24,32], index: 3, kind: input, shape index: {}]
  %s4 = inlined_call_operand.vmem [shape: s32[2,8,1], index: 4, kind: input, shape index: {}]
  %s5 = inlined_call_operand.vmem [shape: f32[16,32], index: 5, kind: input, shape index: {}]
  %s6 = inlined_call_operand.vmem [shape: f32[16,32], index: 6, kind: input, shape index: {}]
  %s7 = inlined_call_operand.vmem [shape: f32[32,1], index: 7, kind: input, shape index: {}]
  %s8 = inlined_call_operand.hbm [shape: f32[2,8,32], index: 8, kind: output, shape index: {0}]
  %s9 = inlined_call_operand.hbm [shape: f32[2,3,8,8], index: 9, kind: output, shape index: {1}]
  %10 = xla_tuple %s8, %s9
  %s11 = sld [smem:[#allocation0]]
  $region85: #{tpu_custom_call.1} parent=0
    _
  %s13 = ssub.s32 1, %s11
  %s14 = scalar_select 0, %s13, %s11
  %s16 = sshll.u32 %s0, 4
  %s17 = int_to_ptr.vmem [resolvable:$true] %s16
  %19 = dma.vmem_to_smem %s17, 16, [#allocation7], [#allocation6]
  %21 = dma.done [#allocation6], 16
  %22 = sfence
  $region1: #{tpu_custom_call.1} parent=0
    #allocation8 [shape = 'u8[8192]{0}', space=vmem, size = 0x2000, scoped, tag = 'output window, operand 0']
    #allocation9 [shape = 's32[2]{0}', space=sflag, size = 0x8, scoped, tag = 'scoped memory for tpu_custom_call.1']
    #allocation10 [shape = 'u8[8192]{0}', space=vmem, size = 0x2000, scoped, tag = 'output window, operand 1']
    #allocation11 [shape = 's32[2]{0}', space=sflag, size = 0x8, scoped, tag = 'scoped memory for tpu_custom_call.1']
    %23 = vsyncpa [#allocation9], 0
    %s24 = scalar_lea.sflag [#allocation9], 1
    %25 = vsyncpa %s24, 0
    %26 = vsyncpa [#allocation11], 0
    %s27 = scalar_lea.sflag [#allocation11], 1
    %28 = vsyncpa %s27, 0
    loop: start=0, step=1, limit=8
    $region2: #{tpu_custom_call.1} parent=1 // loop_pre_header
      _
    $region3: #{tpu_custom_call.1} parent=1 // loop_header
      %s30 = sphi 0, %s34
      %p31 = scmp.ge.s32.totalorder %s30, 8
      %s37 = sphi 0, %s56
      %s38 = sphi 0, %s52
      %s39 = sphi 0, %s48
      %s40 = sphi 0, %s37
      %s41 = sphi 0, %s38
      %s42 = sphi 0, %s39
      %s43 = sphi 0, %s40
      %s44 = sphi 0, %s41
      %s45 = sphi 0, %s42
      %s61 = sphi 0, %s63
      %s64 = sphi 0, %s61
      %s65 = sphi 0, %s64
      %s81 = sphi 0, %s65
      %s89 = sphi 0, %s91
      %s92 = sphi 0, %s89
      %s93 = sphi 0, %s92
      %s109 = sphi 0, %s93
      %s117 = sphi 0, %s119
      %s120 = sphi 0, %s117
      %s121 = sphi 0, %s120
      %s137 = sphi 0, %s121
      %s145 = sphi 0, %s147
      %s148 = sphi 0, %s145
      %s149 = sphi 0, %s148
      %s165 = sphi 0, %s149
      %s169 = sphi 0, %s169
      %s171 = sphi 0, %s169
      %s172 = sphi 0, %s171
      %s186 = sphi 0, %s172
      %s190 = sphi 0, %s190
      %s192 = sphi 0, %s190
      %s193 = sphi 0, %s192
      %s207 = sphi 0, %s193
      %s211 = sphi 0, %s211
      %s213 = sphi 0, %s211
      %s214 = sphi 0, %s213
      %s228 = sphi 0, %s214
      %s236 = sphi 0, %s238
      %s239 = sphi 0, %s236
      %s240 = sphi 0, %s239
      %s256 = sphi 0, %s240
      %s266 = sphi 0, %s268
      %s269 = sphi 0, %s266
      %s270 = sphi 0, %s269
      %s286 = sphi 0, %s270
    $region4: #{tpu_custom_call.1} parent=1 // loop_header_branch
      %33 = sbr.rel (%p31) target = $region8
    $region5: #{tpu_custom_call.1} parent=1 // loop_body
      %s35 = ssub.s32 %s30, 1
      %s36 = ssub.s32 %s30, 2
      %s46 = sadd.s32 1, %s39
      %p47 = scmp.ge.s32.totalorder %s46, 3
      %s48 = scalar_select %p47, 0, %s46
      %s49 = sadd.s32 1, %s38
      %s50 = scalar_select %p47, %s49, %s38
      %p51 = scmp.ge.s32.totalorder %s50, 1
      %s52 = scalar_select %p51, 0, %s50
      %s53 = sadd.s32 1, %s37
      %s54 = scalar_select %p51, %s53, %s37
      %p55 = scmp.ge.s32.totalorder %s54, 2
      %s56 = scalar_select %p55, 0, %s54
      %s57 = ssub.s32 %s37, %s56
      %s58 = ssub.s32 %s38, %s52
      %s59 = sor.u32 %s57, %s58
      %p60 = scmp.eq.s32.totalorder %s59, 0
      %s62 = sadd.s32 %s61, 1
      %s63 = scalar_select %p60, %s61, %s62
      %p66 = pneg %p60
      %p67 = scmp.eq.s32.totalorder %s30, 5
      %p68 = por %p66, %p67
      %p69 = scmp.ne.s32.totalorder %s61, %s64
      %p70 = scmp.eq.s32.totalorder %s30, 0
      %p71 = por %p69, %p70
      %p72 = scmp.ne.s32.totalorder %s61, %s64
      %p73 = scmp.eq.s32.totalorder %s35, 5
      %p74 = por %p72, %p73
      %p75 = scmp.ne.s32.totalorder %s64, %s65
      %p76 = scmp.eq.s32.totalorder %s35, 0
      %p77 = por %p75, %p76
      %p78 = scmp.ne.s32.totalorder %s64, %s65
      %p79 = scmp.eq.s32.totalorder %s36, 5
      %p80 = por %p78, %p79
      %p82 = scmp.ne.s32.totalorder %s65, %s81
      %p83 = scmp.eq.s32.totalorder %s36, 0
      %p84 = por %p82, %p83
      %s85 = ssub.s32 %s37, %s56
      %s86 = ssub.s32 %s39, %s48
      %s87 = sor.u32 %s85, %s86
      %p88 = scmp.eq.s32.totalorder %s87, 0
      %s90 = sadd.s32 %s89, 1
      %s91 = scalar_select %p88, %s89, %s90
      %p94 = pneg %p88
      %p95 = scmp.eq.s32.totalorder %s30, 5
      %p96 = por %p94, %p95
      %p97 = scmp.ne.s32.totalorder %s89, %s92
      %p98 = scmp.eq.s32.totalorder %s30, 0
      %p99 = por %p97, %p98
      %p100 = scmp.ne.s32.totalorder %s89, %s92
      %p101 = scmp.eq.s32.totalorder %s35, 5
      %p102 = por %p100, %p101
      %p103 = scmp.ne.s32.totalorder %s92, %s93
      %p104 = scmp.eq.s32.totalorder %s35, 0
      %p105 = por %p103, %p104
      %p106 = scmp.ne.s32.totalorder %s92, %s93
      %p107 = scmp.eq.s32.totalorder %s36, 5
      %p108 = por %p106, %p107
      %p110 = scmp.ne.s32.totalorder %s93, %s109
      %p111 = scmp.eq.s32.totalorder %s36, 0
      %p112 = por %p110, %p111
      %s113 = ssub.s32 %s37, %s56
      %s114 = ssub.s32 %s39, %s48
      %s115 = sor.u32 %s113, %s114
      %p116 = scmp.eq.s32.totalorder %s115, 0
      %s118 = sadd.s32 %s117, 1
      %s119 = scalar_select %p116, %s117, %s118
      %p122 = pneg %p116
      %p123 = scmp.eq.s32.totalorder %s30, 5
      %p124 = por %p122, %p123
      %p125 = scmp.ne.s32.totalorder %s117, %s120
      %p126 = scmp.eq.s32.totalorder %s30, 0
      %p127 = por %p125, %p126
      %p128 = scmp.ne.s32.totalorder %s117, %s120
      %p129 = scmp.eq.s32.totalorder %s35, 5
      %p130 = por %p128, %p129
      %p131 = scmp.ne.s32.totalorder %s120, %s121
      %p132 = scmp.eq.s32.totalorder %s35, 0
      %p133 = por %p131, %p132
      %p134 = scmp.ne.s32.totalorder %s120, %s121
      %p135 = scmp.eq.s32.totalorder %s36, 5
      %p136 = por %p134, %p135
      %p138 = scmp.ne.s32.totalorder %s121, %s137
      %p139 = scmp.eq.s32.totalorder %s36, 0
      %p140 = por %p138, %p139
      %s141 = ssub.s32 %s37, %s56
      %s142 = ssub.s32 %s38, %s52
      %s143 = sor.u32 %s141, %s142
      %p144 = scmp.eq.s32.totalorder %s143, 0
      %s146 = sadd.s32 %s145, 1
      %s147 = scalar_select %p144, %s145, %s146
      %p150 = pneg %p144
      %p151 = scmp.eq.s32.totalorder %s30, 5
      %p152 = por %p150, %p151
      %p153 = scmp.ne.s32.totalorder %s145, %s148
      %p154 = scmp.eq.s32.totalorder %s30, 0
      %p155 = por %p153, %p154
      %p156 = scmp.ne.s32.totalorder %s145, %s148
      %p157 = scmp.eq.s32.totalorder %s35, 5
      %p158 = por %p156, %p157
      %p159 = scmp.ne.s32.totalorder %s148, %s149
      %p160 = scmp.eq.s32.totalorder %s35, 0
      %p161 = por %p159, %p160
      %p162 = scmp.ne.s32.totalorder %s148, %s149
      %p163 = scmp.eq.s32.totalorder %s36, 5
      %p164 = por %p162, %p163
      %p166 = scmp.ne.s32.totalorder %s149, %s165
      %p167 = scmp.eq.s32.totalorder %s36, 0
      %p168 = por %p166, %p167
      %s170 = sadd.s32 %s169, 1
      %p173 = scmp.eq.s32.totalorder %s30, 5
      %p174 = scmp.ne.s32.totalorder %s169, %s171
      %p175 = scmp.eq.s32.totalorder %s30, 0
      %p176 = por %p174, %p175
      %p177 = scmp.ne.s32.totalorder %s169, %s171
      %p178 = scmp.eq.s32.totalorder %s35, 5
      %p179 = por %p177, %p178
      %p180 = scmp.ne.s32.totalorder %s171, %s172
      %p181 = scmp.eq.s32.totalorder %s35, 0
      %p182 = por %p180, %p181
      %p183 = scmp.ne.s32.totalorder %s171, %s172
      %p184 = scmp.eq.s32.totalorder %s36, 5
      %p185 = por %p183, %p184
      %p187 = scmp.ne.s32.totalorder %s172, %s186
      %p188 = scmp.eq.s32.totalorder %s36, 0
      %p189 = por %p187, %p188
      %s191 = sadd.s32 %s190, 1
      %p194 = scmp.eq.s32.totalorder %s30, 5
      %p195 = scmp.ne.s32.totalorder %s190, %s192
      %p196 = scmp.eq.s32.totalorder %s30, 0
      %p197 = por %p195, %p196
      %p198 = scmp.ne.s32.totalorder %s190, %s192
      %p199 = scmp.eq.s32.totalorder %s35, 5
      %p200 = por %p198, %p199
      %p201 = scmp.ne.s32.totalorder %s192, %s193
      %p202 = scmp.eq.s32.totalorder %s35, 0
      %p203 = por %p201, %p202
      %p204 = scmp.ne.s32.totalorder %s192, %s193
      %p205 = scmp.eq.s32.totalorder %s36, 5
      %p206 = por %p204, %p205
      %p208 = scmp.ne.s32.totalorder %s193, %s207
      %p209 = scmp.eq.s32.totalorder %s36, 0
      %p210 = por %p208, %p209
      %s212 = sadd.s32 %s211, 1
      %p215 = scmp.eq.s32.totalorder %s30, 5
      %p216 = scmp.ne.s32.totalorder %s211, %s213
      %p217 = scmp.eq.s32.totalorder %s30, 0
      %p218 = por %p216, %p217
      %p219 = scmp.ne.s32.totalorder %s211, %s213
      %p220 = scmp.eq.s32.totalorder %s35, 5
      %p221 = por %p219, %p220
      %p222 = scmp.ne.s32.totalorder %s213, %s214
      %p223 = scmp.eq.s32.totalorder %s35, 0
      %p224 = por %p222, %p223
      %p225 = scmp.ne.s32.totalorder %s213, %s214
      %p226 = scmp.eq.s32.totalorder %s36, 5
      %p227 = por %p225, %p226
      %p229 = scmp.ne.s32.totalorder %s214, %s228
      %p230 = scmp.eq.s32.totalorder %s36, 0
      %p231 = por %p229, %p230
      %s232 = ssub.s32 %s37, %s56
      %s233 = ssub.s32 %s38, %s52
      %s234 = sor.u32 %s232, %s233
      %p235 = scmp.eq.s32.totalorder %s234, 0
      %s237 = sadd.s32 %s236, 1
      %s238 = scalar_select %p235, %s236, %s237
      %p241 = pneg %p235
      %p242 = scmp.eq.s32.totalorder %s30, 5
      %p243 = por %p241, %p242
      %p244 = scmp.ne.s32.totalorder %s236, %s239
      %p245 = scmp.eq.s32.totalorder %s30, 0
      %p246 = por %p244, %p245
      %p247 = scmp.ne.s32.totalorder %s236, %s239
      %p248 = scmp.eq.s32.totalorder %s35, 5
      %p249 = por %p247, %p248
      %p250 = scmp.ne.s32.totalorder %s239, %s240
      %p251 = scmp.eq.s32.totalorder %s35, 0
      %p252 = por %p250, %p251
      %p253 = scmp.ne.s32.totalorder %s239, %s240
      %p254 = scmp.eq.s32.totalorder %s36, 5
      %p255 = por %p253, %p254
      %p257 = scmp.ne.s32.totalorder %s240, %s256
      %p258 = scmp.eq.s32.totalorder %s36, 0
      %p259 = por %p257, %p258
      %s260 = ssub.s32 %s37, %s56
      %s261 = ssub.s32 %s39, %s48
      %s262 = sor.u32 %s260, %s261
      %s263 = ssub.s32 %s38, %s52
      %s264 = sor.u32 %s262, %s263
      %p265 = scmp.eq.s32.totalorder %s264, 0
      %s267 = sadd.s32 %s266, 1
      %s268 = scalar_select %p265, %s266, %s267
      %p271 = pneg %p265
      %p272 = scmp.eq.s32.totalorder %s30, 5
      %p273 = por %p271, %p272
      %p274 = scmp.ne.s32.totalorder %s266, %s269
      %p275 = scmp.eq.s32.totalorder %s30, 0
      %p276 = por %p274, %p275
      %p277 = scmp.ne.s32.totalorder %s266, %s269
      %p278 = scmp.eq.s32.totalorder %s35, 5
      %p279 = por %p277, %p278
      %p280 = scmp.ne.s32.totalorder %s269, %s270
      %p281 = scmp.eq.s32.totalorder %s35, 0
      %p282 = por %p280, %p281
      %p283 = scmp.ne.s32.totalorder %s269, %s270
      %p284 = scmp.eq.s32.totalorder %s36, 5
      %p285 = por %p283, %p284
      %p287 = scmp.ne.s32.totalorder %s270, %s286
      %p288 = scmp.eq.s32.totalorder %s36, 0
      %p289 = por %p287, %p288
      %p290 = scmp.le.s32.totalorder 1, %s30
      %p291 = scmp.lt.s32.totalorder %s30, 7
      %p292 = pnand %p290, %p291
      %p293 = pneg %p292
      // Predicated region
      $region9: #{tpu_custom_call.1} parent=5 // pred_check
        _
      $region10: #{tpu_custom_call.1} parent=5 // pred_check_branch
        %295 = sbr.rel (%p292) target = $region12
      $region11: #{tpu_custom_call.1} parent=5 // pred_region
        %s296 = ssub.s32 %s30, 1
        // Predicated region
        $region13: #{tpu_custom_call.1} parent=11 // pred_check
          %p297 = pneg %p182
        $region14: #{tpu_custom_call.1} parent=11 // pred_check_branch
          %299 = sbr.rel (%p297) target = $region16
        $region15: #{tpu_custom_call.1} parent=11 // pred_region
          _
        $region16: #{tpu_custom_call.1} parent=11 // pred_fallthru
          _
        // Predicated region
        $region17: #{tpu_custom_call.1} parent=11 // pred_check
          %p300 = pneg %p203
        $region18: #{tpu_custom_call.1} parent=11 // pred_check_branch
          %302 = sbr.rel (%p300) target = $region20
        $region19: #{tpu_custom_call.1} parent=11 // pred_region
          _
        $region20: #{tpu_custom_call.1} parent=11 // pred_fallthru
          _
        // Predicated region
        $region21: #{tpu_custom_call.1} parent=11 // pred_check
          %p303 = pneg %p224
        $region22: #{tpu_custom_call.1} parent=11 // pred_check_branch
          %305 = sbr.rel (%p303) target = $region24
        $region23: #{tpu_custom_call.1} parent=11 // pred_region
          _
        $region24: #{tpu_custom_call.1} parent=11 // pred_fallthru
          _
      $region12: #{tpu_custom_call.1} parent=5 // pred_fallthru
        _
      %p306 = scmp.lt.s32.totalorder %s30, 6
      // Predicated region
      $region25: #{tpu_custom_call.1} parent=5 // pred_check
        %p307 = pneg %p306
      $region26: #{tpu_custom_call.1} parent=5 // pred_check_branch
        %309 = sbr.rel (%p307) target = $region28
      $region27: #{tpu_custom_call.1} parent=5 // pred_region
        // Predicated region
        $region29: #{tpu_custom_call.1} parent=27 // pred_check
          %p310 = pneg %p71
        $region30: #{tpu_custom_call.1} parent=27 // pred_check_branch
          %312 = sbr.rel (%p310) target = $region32
        $region31: #{tpu_custom_call.1} parent=27 // pred_region
          %p313 = scmp.lt.s32.totalorder %s37, 1
          %s314 = scalar_select %p313, %s37, 1
          %p315 = scmp.lt.s32.totalorder %s38, 0
          %s316 = scalar_select %p315, %s38, 0
          %s317 = sadd.s32 %s316, %s314
          %s318 = smul.addr %s317, 8
          %s319 = scalar_lea.vmem %s1, %s318
        $region32: #{tpu_custom_call.1} parent=27 // pred_fallthru
          _
        // Predicated region
        $region33: #{tpu_custom_call.1} parent=27 // pred_check
          %p320 = pneg %p99
        $region34: #{tpu_custom_call.1} parent=27 // pred_check_branch
          %322 = sbr.rel (%p320) target = $region36
        $region35: #{tpu_custom_call.1} parent=27 // pred_region
          %p323 = scmp.lt.s32.totalorder %s37, 1
          %s324 = scalar_select %p323, %s37, 1
          %p325 = scmp.lt.s32.totalorder %s39, 2
          %s326 = scalar_select %p325, %s39, 2
          %s327 = smul.addr %s324, 3
          %s328 = sadd.s32 %s326, %s327
          %s329 = smul.addr %s328, 8
          %s330 = scalar_lea.vmem %s2, %s329
        $region36: #{tpu_custom_call.1} parent=27 // pred_fallthru
          _
        // Predicated region
        $region37: #{tpu_custom_call.1} parent=27 // pred_check
          %p331 = pneg %p127
        $region38: #{tpu_custom_call.1} parent=27 // pred_check_branch
          %333 = sbr.rel (%p331) target = $region40
        $region39: #{tpu_custom_call.1} parent=27 // pred_region
          %p334 = scmp.lt.s32.totalorder %s37, 1
          %s335 = scalar_select %p334, %s37, 1
          %p336 = scmp.lt.s32.totalorder %s39, 2
          %s337 = scalar_select %p336, %s39, 2
          %s338 = smul.addr %s335, 3
          %s339 = sadd.s32 %s337, %s338
          %s340 = smul.addr %s339, 8
          %s341 = scalar_lea.vmem %s3, %s340
        $region40: #{tpu_custom_call.1} parent=27 // pred_fallthru
          _
        // Predicated region
        $region41: #{tpu_custom_call.1} parent=27 // pred_check
          %p342 = pneg %p155
        $region42: #{tpu_custom_call.1} parent=27 // pred_check_branch
          %344 = sbr.rel (%p342) target = $region44
        $region43: #{tpu_custom_call.1} parent=27 // pred_region
          %p345 = scmp.lt.s32.totalorder %s37, 1
          %s346 = scalar_select %p345, %s37, 1
          %p347 = scmp.lt.s32.totalorder %s38, 0
          %s348 = scalar_select %p347, %s38, 0
          %s349 = sadd.s32 %s348, %s346
          %s350 = smul.addr %s349, 8
          %s351 = scalar_lea.vmem %s4, %s350
        $region44: #{tpu_custom_call.1} parent=27 // pred_fallthru
          _
      $region28: #{tpu_custom_call.1} parent=5 // pred_fallthru
        _
      %p352 = scmp.le.s32.totalorder 1, %s30
      %p353 = scmp.lt.s32.totalorder %s30, 7
      %p354 = pnand %p352, %p353
      %p355 = pneg %p354
      // Predicated region
      $region45: #{tpu_custom_call.1} parent=5 // pred_check
        _
      $region46: #{tpu_custom_call.1} parent=5 // pred_check_branch
        %357 = sbr.rel (%p354) target = $region48
      $region47: #{tpu_custom_call.1} parent=5 // pred_region
        %s358 = ssub.s32 %s30, 1
        %p359 = scmp.lt.s32.totalorder %s40, 1
        %s360 = scalar_select %p359, %s40, 1
        %p361 = scmp.lt.s32.totalorder %s41, 0
        %s362 = scalar_select %p361, %s41, 0
        %s363 = sadd.s32 %s362, %s360
        %s364 = smul.addr %s363, 8
        %s365 = scalar_lea.vmem %s1, %s364
        %p366 = pneg %p77
        %p367 = pneg %p74
        %p368 = scmp.lt.s32.totalorder %s40, 1
        %s369 = scalar_select %p368, %s40, 1
        %p370 = scmp.lt.s32.totalorder %s42, 2
        %s371 = scalar_select %p370, %s42, 2
        %s372 = smul.addr %s369, 3
        %s373 = sadd.s32 %s371, %s372
        %s374 = smul.addr %s373, 8
        %s375 = scalar_lea.vmem %s2, %s374
        %p376 = pneg %p105
        %p377 = pneg %p102
        %p378 = scmp.lt.s32.totalorder %s40, 1
        %s379 = scalar_select %p378, %s40, 1
        %p380 = scmp.lt.s32.totalorder %s42, 2
        %s381 = scalar_select %p380, %s42, 2
        %s382 = smul.addr %s379, 3
        %s383 = sadd.s32 %s381, %s382
        %s384 = smul.addr %s383, 8
        %s385 = scalar_lea.vmem %s3, %s384
        %p386 = pneg %p133
        %p387 = pneg %p130
        %p388 = scmp.lt.s32.totalorder %s40, 1
        %s389 = scalar_select %p388, %s40, 1
        %p390 = scmp.lt.s32.totalorder %s41, 0
        %s391 = scalar_select %p390, %s41, 0
        %s392 = sadd.s32 %s391, %s389
        %s393 = smul.addr %s392, 8
        %s394 = scalar_lea.vmem %s4, %s393
        %p395 = pneg %p161
        %p396 = pneg %p158
        %p397 = pneg %p182
        %p398 = pneg %p179
        %p399 = pneg %p203
        %p400 = pneg %p200
        %p401 = pneg %p224
        %p402 = pneg %p221
        %p403 = pneg %p252
        %p404 = pneg %p249
        %s405 = sand.u32 %s239, 1
        %s406 = scalar_lea.sflag [#allocation9], %s405
        %s407 = sand.u32 %s239, 1
        %s408 = smul.addr %s407, 8
        %s409 = scalar_lea.vmem [#allocation8], %s408
        %p410 = pneg %p282
        %p411 = pneg %p279
        %s412 = sand.u32 %s269, 1
        %s413 = scalar_lea.sflag [#allocation11], %s412
        %s414 = sand.u32 %s269, 1
        %s415 = smul.addr %s414, 8
        %s416 = scalar_lea.vmem [#allocation10], %s415
        %p417 = scmp.lt.s32.totalorder %s40, 1
        %s418 = scalar_select %p417, %s40, 1
        %p419 = scmp.lt.s32.totalorder %s41, 0
        %s420 = scalar_select %p419, %s41, 0
        %s421 = sadd.s32 %s420, %s418
        %s422 = smul.addr %s421, 8
        %s423 = scalar_lea.vmem %s1, %s422
        %p424 = scmp.lt.s32.totalorder %s40, 1
        %s425 = scalar_select %p424, %s40, 1
        %p426 = scmp.lt.s32.totalorder %s42, 2
        %s427 = scalar_select %p426, %s42, 2
        %s428 = smul.addr %s425, 3
        %s429 = sadd.s32 %s427, %s428
        %s430 = smul.addr %s429, 8
        %s431 = scalar_lea.vmem %s2, %s430
        %p432 = scmp.lt.s32.totalorder %s40, 1
        %s433 = scalar_select %p432, %s40, 1
        %p434 = scmp.lt.s32.totalorder %s42, 2
        %s435 = scalar_select %p434, %s42, 2
        %s436 = smul.addr %s433, 3
        %s437 = sadd.s32 %s435, %s436
        %s438 = smul.addr %s437, 8
        %s439 = scalar_lea.vmem %s3, %s438
        %p440 = scmp.lt.s32.totalorder %s40, 1
        %s441 = scalar_select %p440, %s40, 1
        %p442 = scmp.lt.s32.totalorder %s41, 0
        %s443 = scalar_select %p442, %s41, 0
        %s444 = sadd.s32 %s443, %s441
        %s445 = smul.addr %s444, 8
        %s446 = scalar_lea.vmem %s4, %s445
        %s447 = smul.u32 %s42, 8
        %p448 = scmp.eq.s32.totalorder %s42, 0
        // Predicated region
        $region49: #{tpu_custom_call.1} parent=47 // pred_check
          %p449 = pneg %p448
        $region50: #{tpu_custom_call.1} parent=47 // pred_check_branch
          %451 = sbr.rel (%p449) target = $region52
        $region51: #{tpu_custom_call.1} parent=47 // pred_region
          %v452 = vld [vmem:[%s423] sm:$0xff]
          %v453 = vld [vmem:[%s5] sm:$0xff]
          %v454 = vld [vmem:[%s5 + $0x8] sm:$0xff]
          %vm455 = vcmask 130048
          %v457 = vsel %vm455, %v452, 0
          %459 = vmatpush.msra.mxu0 0.0
          %460 = vmatpush.msra.mxu0 0.0
          %461 = vmatpush.msra.mxu0 0.0
          %462 = vmatpush.msra.mxu0 0.0
          %463 = vmatpush.msra.mxu0 0.0
          %464 = vmatpush.msra.mxu0 0.0
          %465 = vmatpush.msra.mxu0 0.0
          %466 = vmatpush.msra.mxu0 0.0
          %467 = vmatpush.msra.mxu0 0.0
          %468 = vmatpush.msra.mxu0 0.0
          %469 = vmatpush.msra.mxu0 0.0
          %470 = vmatpush.msra.mxu0 0.0
          %471 = vmatpush.msra.mxu0 0.0
          %472 = vmatpush.msra.mxu0 0.0
          %473 = vmatpush.msra.mxu0 %v454
          %474 = vmatpush.msra.mxu0 %v453
          %475 = vmatmul.f32.gmra.mxu0 %v457
          %v476 = vpop.f32.mrf.mxu0
          %v477 = vadd.f32 0.0, %v476
          %478 = vdwg.mxu0
          %vm479 = vcmask 261120
          %480 = vst.msk [vmem:[#allocation2] sm:$0xff] %vm479, %v477
          %vm481 = vcmask 7168
          %482 = vst.msk [vmem:[#allocation3] sm:$0xff] %vm481, -1e+30
          %483 = vst.msk [vmem:[#allocation4] sm:$0xff] %vm481, 0.0
          %484 = vst.msk [vmem:[#allocation5] sm:$0xff] %vm479, 0.0
        $region52: #{tpu_custom_call.1} parent=47 // pred_fallthru
          _
        %s485 = sadd.s32 %s40, %s41
        %s486 = sld [smem:[#allocation7 + %s485]]
        %p487 = scmp.ge.s32.totalorder %s447, %s486
        // Predicated region
        $region53: #{tpu_custom_call.1} parent=47 // pred_check
          %p488 = pneg %p487
        $region54: #{tpu_custom_call.1} parent=47 // pred_check_branch
          %490 = sbr.rel (%p488) target = $region56
        $region55: #{tpu_custom_call.1} parent=47 // pred_region
          %vm491 = vcmask 64512
          %492 = vst.msk [vmem:[%s416] sm:$0xff] %vm491, -1000000.0
        $region56: #{tpu_custom_call.1} parent=47 // pred_fallthru
          _
        %p493 = scmp.lt.s32.totalorder %s447, %s486
        // Predicated region
        $region57: #{tpu_custom_call.1} parent=47 // pred_check
          %p494 = pneg %p493
        $region58: #{tpu_custom_call.1} parent=47 // pred_check_branch
          %496 = sbr.rel (%p494) target = $region60
        $region59: #{tpu_custom_call.1} parent=47 // pred_region
          %v497 = vld [vmem:[%s431] sm:$0xff]
          %v498 = vld [vmem:[%s6] sm:$0xff]
          %v499 = vld [vmem:[%s6 + $0x8] sm:$0xff]
          %vm500 = vcmask 130048
          %v502 = vsel %vm500, %v497, 0
          %504 = vmatpush.msra.mxu0 0.0
          %505 = vmatpush.msra.mxu0 0.0
          %506 = vmatpush.msra.mxu0 0.0
          %507 = vmatpush.msra.mxu0 0.0
          %508 = vmatpush.msra.mxu0 0.0
          %509 = vmatpush.msra.mxu0 0.0
          %510 = vmatpush.msra.mxu0 0.0
          %511 = vmatpush.msra.mxu0 0.0
          %512 = vmatpush.msra.mxu0 0.0
          %513 = vmatpush.msra.mxu0 0.0
          %514 = vmatpush.msra.mxu0 0.0
          %515 = vmatpush.msra.mxu0 0.0
          %516 = vmatpush.msra.mxu0 0.0
          %517 = vmatpush.msra.mxu0 0.0
          %518 = vmatpush.msra.mxu0 %v499
          %519 = vmatpush.msra.mxu0 %v498
          %520 = vmatmul.f32.gmra.mxu0 %v502
          %v521 = vpop.f32.mrf.mxu0
          %v522 = vadd.f32 0.0, %v521
          %523 = vdwg.mxu0
          %v524 = vld [vmem:[#allocation2] sm:$0xff]
          %v526 = vrot.slane %v524, 1
          %v527 = vrot.slane %v524, 2
          %v528 = vrot.slane %v524, 3
          %v529 = vrot.slane %v524, 4
          %v530 = vrot.slane %v524, 5
          %v531 = vrot.slane %v524, 6
          %v532 = vrot.slane %v524, 7
          %v533 = vperm.slane %v524, 0
          %v534 = vperm.slane %v526, 0
          %v535 = vperm.slane %v527, 0
          %v536 = vperm.slane %v528, 0
          %v537 = vperm.slane %v529, 0
          %v538 = vperm.slane %v530, 0
          %v539 = vperm.slane %v531, 0
          %v540 = vperm.slane %v532, 0
          %v549 = vadd.f32 %v533, %v522
          %v550 = vadd.f32 %v534, %v522
          %v551 = vadd.f32 %v535, %v522
          %v552 = vadd.f32 %v536, %v522
          %v553 = vadd.f32 %v537, %v522
          %v554 = vadd.f32 %v538, %v522
          %v555 = vadd.f32 %v539, %v522
          %v556 = vadd.f32 %v540, %v522
          %v557 = vtanh.pop %v549
          %v558 = vtanh.pop %v550
          %v559 = vtanh.pop %v551
          %v560 = vtanh.pop %v552
          %v561 = vtanh.pop %v553
          %v562 = vtanh.pop %v554
          %v563 = vtanh.pop %v555
          %v564 = vtanh.pop %v556
          %v565 = vld [vmem:[%s7] sm:$0xff]
          %v566 = vld [vmem:[%s7 + $0x8] sm:$0xff]
          %v567 = vld [vmem:[%s7 + $0x10] sm:$0xff]
          %v568 = vld [vmem:[%s7 + $0x18] sm:$0xff]
          %vm569 = vcmask 261120
          %v571 = vsel %vm569, %v557, 0
          %v574 = vsel %vm569, %v558, 0
          %v577 = vsel %vm569, %v559, 0
          %v580 = vsel %vm569, %v560, 0
          %v583 = vsel %vm569, %v561, 0
          %v586 = vsel %vm569, %v562, 0
          %v589 = vsel %vm569, %v563, 0
          %v592 = vsel %vm569, %v564, 0
          %594 = vmatpush.msra.mxu0 0.0
          %595 = vmatpush.msra.mxu0 0.0
          %596 = vmatpush.msra.mxu0 0.0
          %597 = vmatpush.msra.mxu0 0.0
          %598 = vmatpush.msra.mxu0 0.0
          %599 = vmatpush.msra.mxu0 0.0
          %600 = vmatpush.msra.mxu0 0.0
          %601 = vmatpush.msra.mxu0 0.0
          %602 = vmatpush.msra.mxu0 0.0
          %603 = vmatpush.msra.mxu0 0.0
          %604 = vmatpush.msra.mxu0 0.0
          %605 = vmatpush.msra.mxu0 0.0
          %606 = vmatpush.msra.mxu0 %v568
          %607 = vmatpush.msra.mxu0 %v567
          %608 = vmatpush.msra.mxu0 %v566
          %609 = vmatpush.msra.mxu0 %v565
          %610 = vmatmul.f32.gmra.mxu0 %v571
          %v611 = vpop.f32.mrf.mxu0
          %v612 = vadd.f32 0.0, %v611
          %613 = vmatmul.f32.gmra.mxu0 %v574
          %v614 = vpop.f32.mrf.mxu0
          %v615 = vadd.f32 0.0, %v614
          %616 = vmatmul.f32.gmra.mxu0 %v577
          %v617 = vpop.f32.mrf.mxu0
          %v618 = vadd.f32 0.0, %v617
          %619 = vmatmul.f32.gmra.mxu0 %v580
          %v620 = vpop.f32.mrf.mxu0
          %v621 = vadd.f32 0.0, %v620
          %622 = vmatmul.f32.gmra.mxu0 %v583
          %v623 = vpop.f32.mrf.mxu0
          %v624 = vadd.f32 0.0, %v623
          %625 = vmatmul.f32.gmra.mxu0 %v586
          %v626 = vpop.f32.mrf.mxu0
          %v627 = vadd.f32 0.0, %v626
          %628 = vmatmul.f32.gmra.mxu0 %v589
          %v629 = vpop.f32.mrf.mxu0
          %v630 = vadd.f32 0.0, %v629
          %631 = vmatmul.f32.gmra.mxu0 %v592
          %v632 = vpop.f32.mrf.mxu0
          %v633 = vadd.f32 0.0, %v632
          %634 = vdwg.mxu0
          %v635 = vlaneseq
          %v636 = vand.u32 %v635, 127
          %v637 = vstv %s447
          %v638 = vadd.s32 %v636, %v637
          %v639 = vld [vmem:[%s446] sm:$0xff]
          %640 = vset.pattern.permute.xlu0 0
          %641 = vperm.xlu0 %640, %v639
          %v642 = vpop.permute.xlu0 %641
          %vm643 = vcmp.lt.s32.totalorder %v638, %v642
          %652 = vset.pattern.permute.xlu0 0
          %653 = vperm.xlu0 %652, %v612
          %v654 = vpop.permute.xlu0 %653
          %655 = vset.pattern.permute.xlu0 0
          %656 = vperm.xlu0 %655, %v615
          %v657 = vpop.permute.xlu0 %656
          %658 = vset.pattern.permute.xlu0 0
          %659 = vperm.xlu0 %658, %v618
          %v660 = vpop.permute.xlu0 %659
          %661 = vset.pattern.permute.xlu0 0
          %662 = vperm.xlu0 %661, %v621
          %v663 = vpop.permute.xlu0 %662
          %664 = vset.pattern.permute.xlu0 0
          %665 = vperm.xlu0 %664, %v624
          %v666 = vpop.permute.xlu0 %665
          %667 = vset.pattern.permute.xlu0 0
          %668 = vperm.xlu0 %667, %v627
          %v669 = vpop.permute.xlu0 %668
          %670 = vset.pattern.permute.xlu0 0
          %671 = vperm.xlu0 %670, %v630
          %v672 = vpop.permute.xlu0 %671
          %673 = vset.pattern.permute.xlu0 0
          %674 = vperm.xlu0 %673, %v633
          %v675 = vpop.permute.xlu0 %674
          %v676 = vperm.slane %v654, %v636
          %v677 = vperm.slane %v657, %v636
          %v678 = vperm.slane %v660, %v636
          %v679 = vperm.slane %v663, %v636
          %v680 = vperm.slane %v666, %v636
          %v681 = vperm.slane %v669, %v636
          %v682 = vperm.slane %v672, %v636
          %v683 = vperm.slane %v675, %v636
          %vm684 = vcmask 1041409
          %v685 = vsel %vm684, %v677, %v676
          %vm686 = vcmask 1042434
          %v687 = vsel %vm686, %v678, %v685
          %vm688 = vcmask 1043459
          %v689 = vsel %vm688, %v679, %v687
          %vm690 = vcmask 1044484
          %v691 = vsel %vm690, %v680, %v689
          %vm692 = vcmask 1045509
          %v693 = vsel %vm692, %v681, %v691
          %vm694 = vcmask 1046534
          %v695 = vsel %vm694, %v682, %v693
          %vm696 = vcmask 1047559
          %v697 = vsel %vm696, %v683, %v695
          %v699 = vsel %vm643, %v697, -1000000.0
          %vm700 = vcmp.lt.s32.totalorder %v638, 24
          %v701 = vsel %vm700, %v699, -1e+30
          %vm702 = vcmask 64512
          %703 = vst.msk [vmem:[%s416] sm:$0xff] %vm702, %v701
          %v704 = vld [vmem:[#allocation3] sm:$0xff]
          %v705 = vsel %vm702, %v701, -inf
          %706 = vmax.xlane.f32.xlu0 %v705
          %v707 = vpop.xlane.xlu0 %706
          %v708 = vmax.f32 %v704, %v707
          %v709 = vsub.f32 %v704, %v708
          %v710 = vmul.f32 %v709, 1.442695
          %v711 = vpow.pop %v710
          %713 = vset.pattern.permute.xlu0 0
          %714 = vperm.xlu0 %713, %v708
          %v715 = vpop.permute.xlu0 %714
          %v717 = vsub.f32 %v701, %v715
          %v718 = vmul.f32 %v717, 1.442695
          %v719 = vpow.pop %v718
          %v720 = vld [vmem:[#allocation4] sm:$0xff]
          %v721 = vmul.f32 %v711, %v720
          %v722 = vsel %vm702, %v719, 0.0
          %723 = vadd.xlane.f32.xlu0 %v722
          %v724 = vpop.xlane.xlu0 %723
          %v725 = vadd.f32 %v721, %v724
          %vm726 = vcmask 7168
          %727 = vst.msk [vmem:[#allocation4] sm:$0xff] %vm726, %v725
          %v728 = vld [vmem:[#allocation5] sm:$0xff]
          %730 = vset.pattern.permute.xlu0 0
          %731 = vperm.xlu0 %730, %v711
          %v732 = vpop.permute.xlu0 %731
          %v734 = vmul.f32 %v732, %v728
          %v735 = vld [vmem:[%s439] sm:$0xff]
          %v737 = vsel %vm702, %v719, 0
          %739 = vmatpush.msra.mxu0 0.0
          %740 = vmatpush.msra.mxu0 0.0
          %741 = vmatpush.msra.mxu0 0.0
          %742 = vmatpush.msra.mxu0 0.0
          %743 = vmatpush.msra.mxu0 0.0
          %744 = vmatpush.msra.mxu0 0.0
          %745 = vmatpush.msra.mxu0 0.0
          %746 = vmatpush.msra.mxu0 0.0
          %747 = vmatpush.msra.mxu0 0.0
          %748 = vmatpush.msra.mxu0 0.0
          %749 = vmatpush.msra.mxu0 0.0
          %750 = vmatpush.msra.mxu0 0.0
          %751 = vmatpush.msra.mxu0 0.0
          %752 = vmatpush.msra.mxu0 0.0
          %753 = vmatpush.msra.mxu0 0.0
          %754 = vmatpush.msra.mxu0 %v735
          %755 = vmatmul.f32.gmra.mxu0 %v737
          %v756 = vpop.f32.mrf.mxu0
          %v757 = vadd.f32 0.0, %v756
          %758 = vdwg.mxu0
          %v759 = vadd.f32 %v734, %v757
          %760 = vst.msk [vmem:[#allocation5] sm:$0xff] %vm569, %v759
          %761 = vst.msk [vmem:[#allocation3] sm:$0xff] %vm726, %v708
        $region60: #{tpu_custom_call.1} parent=47 // pred_fallthru
          _
        %p762 = scmp.eq.s32.totalorder %s42, 2
        // Predicated region
        $region61: #{tpu_custom_call.1} parent=47 // pred_check
          %p763 = pneg %p762
        $region62: #{tpu_custom_call.1} parent=47 // pred_check_branch
          %765 = sbr.rel (%p763) target = $region64
        $region63: #{tpu_custom_call.1} parent=47 // pred_region
          %v766 = vld [vmem:[#allocation4] sm:$0xff]
          %v767 = vrcp.pop %v766
          %v768 = vld [vmem:[#allocation5] sm:$0xff]
          %770 = vset.pattern.permute.xlu0 0
          %771 = vperm.xlu0 %770, %v767
          %v772 = vpop.permute.xlu0 %771
          %v774 = vmul.f32 %v768, %v772
          %vm775 = vcmask 261120
          %776 = vst.msk [vmem:[%s409] sm:$0xff] %vm775, %v774
        $region64: #{tpu_custom_call.1} parent=47 // pred_fallthru
          _
        %s777 = sand.u32 %s239, 1
        %s778 = scalar_lea.sflag [#allocation9], %s777
        %s779 = sand.u32 %s239, 1
        %s780 = smul.addr %s779, 8
        %s781 = scalar_lea.vmem [#allocation8], %s780
        %s782 = sand.u32 %s269, 1
        %s783 = scalar_lea.sflag [#allocation11], %s782
        %s784 = sand.u32 %s269, 1
        %s785 = smul.addr %s784, 8
        %s786 = scalar_lea.vmem [#allocation10], %s785
        // Predicated region
        $region65: #{tpu_custom_call.1} parent=47 // pred_check
          %p787 = pneg %p249
        $region66: #{tpu_custom_call.1} parent=47 // pred_check_branch
          %789 = sbr.rel (%p787) target = $region68
        $region67: #{tpu_custom_call.1} parent=47 // pred_region
          %791 = vsyncadd %s778, 0
          %s792 = sadd.s32 %s41, %s40
          %s793 = smul.addr %s792, 8
          %s794 = scalar_lea.hbm %s8, %s793
          %s796 = sshll.u32 %s781, 4
          %s797 = int_to_ptr.vmem [resolvable:$true] %s796
          %s798 = sshll.u32 %s794, 4
          %s799 = int_to_ptr.hbm [resolvable:$true] %s798
          %801 = dma.vmem_to_hbm [thread:$0]  %s797, 128, %s799, %s778
        $region68: #{tpu_custom_call.1} parent=47 // pred_fallthru
          _
        // Predicated region
        $region69: #{tpu_custom_call.1} parent=47 // pred_check
          %p802 = pneg %p279
        $region70: #{tpu_custom_call.1} parent=47 // pred_check_branch
          %804 = sbr.rel (%p802) target = $region72
        $region71: #{tpu_custom_call.1} parent=47 // pred_region
          %806 = vsyncadd %s783, 0
          %s807 = sadd.s32 %s41, %s42
          %s808 = smul.addr %s40, 3
          %s809 = sadd.s32 %s807, %s808
          %s810 = smul.addr %s809, 8
          %s811 = scalar_lea.hbm %s9, %s810
          %s813 = sshll.u32 %s786, 4
          %s814 = int_to_ptr.vmem [resolvable:$true] %s813
          %s815 = sshll.u32 %s811, 4
          %s816 = int_to_ptr.hbm [resolvable:$true] %s815
          %818 = dma.vmem_to_hbm [thread:$0]  %s814, 128, %s816, %s783
        $region72: #{tpu_custom_call.1} parent=47 // pred_fallthru
          _
      $region48: #{tpu_custom_call.1} parent=5 // pred_fallthru
        _
      %p819 = scmp.le.s32.totalorder 2, %s30
      // Predicated region
      $region73: #{tpu_custom_call.1} parent=5 // pred_check
        %p820 = pneg %p819
      $region74: #{tpu_custom_call.1} parent=5 // pred_check_branch
        %822 = sbr.rel (%p820) target = $region76
      $region75: #{tpu_custom_call.1} parent=5 // pred_region
        %s823 = ssub.s32 %s30, 2
        // Predicated region
        $region77: #{tpu_custom_call.1} parent=75 // pred_check
          %p824 = pneg %p255
        $region78: #{tpu_custom_call.1} parent=75 // pred_check_branch
          %826 = sbr.rel (%p824) target = $region80
        $region79: #{tpu_custom_call.1} parent=75 // pred_region
          %s827 = sand.u32 %s240, 1
          %s828 = scalar_lea.sflag [#allocation9], %s827
          %s829 = sand.u32 %s240, 1
          %s830 = smul.addr %s829, 8
          %s831 = scalar_lea.vmem [#allocation8], %s830
          %833 = dma.done %s828, 128
        $region80: #{tpu_custom_call.1} parent=75 // pred_fallthru
          _
        // Predicated region
        $region81: #{tpu_custom_call.1} parent=75 // pred_check
          %p834 = pneg %p285
        $region82: #{tpu_custom_call.1} parent=75 // pred_check_branch
          %836 = sbr.rel (%p834) target = $region84
        $region83: #{tpu_custom_call.1} parent=75 // pred_region
          %s837 = sand.u32 %s270, 1
          %s838 = scalar_lea.sflag [#allocation11], %s837
          %s839 = sand.u32 %s270, 1
          %s840 = smul.addr %s839, 8
          %s841 = scalar_lea.vmem [#allocation10], %s840
          %843 = dma.done %s838, 128
        $region84: #{tpu_custom_call.1} parent=75 // pred_fallthru
          _
      $region76: #{tpu_custom_call.1} parent=5 // pred_fallthru
        _
    $region6: #{tpu_custom_call.1} parent=1 // loop_footer
      %s34 = sadd.s32 1, %s30
    $region7: #{tpu_custom_call.1} parent=1 // loop_footer_branch
      %29 = sbr.rel target = $region3
    $region8: #{tpu_custom_call.1} parent=1 // loop_exit
      _
    %844 = vsyncpa [#allocation9], 1
    %s845 = scalar_lea.sflag [#allocation9], 1
    %846 = vsyncpa %s845, 1
    %847 = vsyncpa [#allocation11], 1
    %s848 = scalar_lea.sflag [#allocation11], 1
    %849 = vsyncpa %s848, 1

</llo_original>
